<compile_context>
chip_gen: v5e
topology: v5e:2x2
jax: 0.10.0
libtpu: 0.0.40
codegen_flags: <defaults>
</compile_context>

<pallas_src>
import numpy as np
import jax
import jax.numpy as jnp
from jax.experimental import pallas as pl
from jax.experimental.pallas import tpu as pltpu


# ---------------------------------------------------------------------------
# Kernel: fused (1x1 conv as matmul) + folded-BN bias + Hardswish
# ---------------------------------------------------------------------------
def focus_conv_kernel(p_ref, w_ref, b_ref, o_ref):
    """
    p_ref : (K, TP)   space-to-depth patches; K=4*C1 on sublanes, TP positions on lanes
    w_ref : (C2, K)   BN-scale-folded 1x1 conv weight
    b_ref : (C2, 1)   folded BN bias (beta - mean*scale), f32
    o_ref : (C2, TP)  output tile (out-channels on sublanes, spatial on lanes)
    """
    acc = jnp.dot(w_ref[...], p_ref[...], preferred_element_type=jnp.float32)  # MXU
    y = acc + b_ref[...]                                    # broadcast over lanes (f32 VPU)
    # Hardswish: y * relu6(y + 3) / 6   (f32 math; cast only at the store)
    o_ref[...] = (y * jnp.clip(y + 3.0, 0.0, 6.0) * (1.0 / 6.0)).astype(o_ref.dtype)


def _pick_spatial_tile(P, per_pos_bytes, vmem_cap_bytes=12 << 20, max_tp=8192):
    """Spatial (lane) tile size.

    Prefers the largest multiple-of-128 divisor of P whose double-buffered
    in+out blocks stay under `vmem_cap_bytes` (v7x/v5e safe).  Tiny P takes the
    full extent (full-array block is always legal); otherwise a lane-aligned
    tile with a Pallas-masked padded tail is used.
    """
    if P <= 512:
        return P
    cap = (min(max_tp, vmem_cap_bytes // max(per_pos_bytes, 1)) // 128) * 128
    cap = max(cap, 128)
    start = min(cap, (P // 128) * 128)
    for tp in range(start, 127, -128):
        if P % tp == 0:
            return tp
    # No lane-aligned divisor under the cap: lane-aligned tile + padded tail.
    return min(cap, ((P + 127) // 128) * 128)


# ---------------------------------------------------------------------------
# Wrapper: Focus.forward (inference / running-stats BN folded into the conv)
# ---------------------------------------------------------------------------
def focus_forward(x, conv_w, bn_gamma, bn_beta, bn_mean, bn_var, eps=1e-5,
                  storage_dtype=None):
    """
    x       : (B, C1, H, W)
    conv_w  : (C2, 4*C1, 1, 1)  Conv2d weight (bias=False)
    bn_*    : (C2,)             BatchNorm2d affine params + running stats
    storage_dtype : optional (e.g. jnp.bfloat16) to halve HBM traffic; default
                    None keeps the module's dtype semantics (out dtype == x dtype).
    returns : (B, C2, H//2, W//2)
    """
    B, C1, H, W = x.shape
    C2 = conv_w.shape[0]
    H2, W2 = H // 2, W // 2
    P = H2 * W2
    K = 4 * C1

    compute_dtype = x.dtype if storage_dtype is None else jnp.dtype(storage_dtype)
    out_dtype = compute_dtype

    # Space-to-depth, same channel order as torch.cat in Focus.forward.
    # TODO(synk): the stride-2 lane de-interleave stays outside the kernel (pure
    # layout op with no efficient Mosaic lowering); allow_input_fusion below lets
    # XLA fuse this producer into the Pallas operand instead of materializing it.
    y = jnp.concatenate(
        [x[..., ::2, ::2], x[..., 1::2, ::2], x[..., ::2, 1::2], x[..., 1::2, 1::2]],
        axis=1,
    )                                                        # (B, 4*C1, H2, W2)
    patches = y.reshape(B, K, P).astype(compute_dtype)       # spatial on the lane dim

    # Fold inference BatchNorm into the 1x1 conv: w' = scale*w, bias = beta - mean*scale.
    scale = bn_gamma / jnp.sqrt(bn_var + eps)                # (C2,)
    w_folded = (conv_w.reshape(C2, K) * scale[:, None]).astype(compute_dtype)
    bias = (bn_beta - bn_mean * scale)[:, None].astype(jnp.float32)   # (C2, 1)

    in_bytes = np.dtype(compute_dtype).itemsize
    out_bytes = np.dtype(out_dtype).itemsize
    per_pos_bytes = 2 * (K * in_bytes + C2 * out_bytes)      # double-buffered in + out
    TP = _pick_spatial_tile(P, per_pos_bytes)

    num_s = pl.cdiv(P, TP)
    if B == 1 and num_s == 1 and P >= 256:
        # Keep >= 2 steps along a parallel axis so both v7x TensorCores are fed.
        TP = max(128, ((TP // 2 + 127) // 128) * 128)
        num_s = pl.cdiv(P, TP)
    grid = (B, num_s)

    cost = pl.CostEstimate(
        flops=2 * B * K * C2 * P,
        transcendentals=0,
        bytes_accessed=int(B * C1 * H * W * in_bytes + C2 * K * in_bytes
                           + B * C2 * P * out_bytes),
    )

    out = pl.pallas_call(
        focus_conv_kernel,
        out_shape=jax.ShapeDtypeStruct((B, C2, P), out_dtype),
        grid=grid,
        in_specs=[
            pl.BlockSpec((pl.Squeezed(), K, TP), lambda b, s: (b, 0, s)),
            pl.BlockSpec((C2, K), lambda b, s: (0, 0)),
            pl.BlockSpec((C2, 1), lambda b, s: (0, 0)),
        ],
        out_specs=pl.BlockSpec((pl.Squeezed(), C2, TP), lambda b, s: (b, 0, s)),
        compiler_params=pltpu.CompilerParams(
            dimension_semantics=("parallel", "parallel"),
            allow_input_fusion=[True, False, False],
        ),
        cost_estimate=cost,
    )(patches, w_folded, bias)

    return out.reshape(B, C2, H2, W2)


# ---------------------------------------------------------------------------
# Pure-JAX reference (mirrors the PyTorch module in eval mode)
# ---------------------------------------------------------------------------
def focus_reference(x, conv_w, bn_gamma, bn_beta, bn_mean, bn_var, eps=1e-5):
    C2 = conv_w.shape[0]
    y = jnp.concatenate(
        [x[..., ::2, ::2], x[..., 1::2, ::2], x[..., ::2, 1::2], x[..., 1::2, 1::2]],
        axis=1,
    )
    z = jnp.einsum("bchw,oc->bohw", y, conv_w.reshape(C2, -1))
    scale = bn_gamma / jnp.sqrt(bn_var + eps)
    z = z * scale[None, :, None, None] + (bn_beta - bn_mean * scale)[None, :, None, None]
    return z * jnp.clip(z + 3.0, 0.0, 6.0) / 6.0


if __name__ == "__main__":
    key = jax.random.PRNGKey(0)
    B, C1, H, W = 2, 4, 16, 16          # input  (batch, channels, height, width)
    C2 = 8                              # output channels of the Focus conv
    k1, k2, k3, k4, k5, k6 = jax.random.split(key, 6)

    x = jax.random.normal(k1, (B, C1, H, W), dtype=jnp.float32)
    conv_w = jax.random.normal(k2, (C2, 4 * C1, 1, 1), dtype=jnp.float32) * 0.1
    bn_gamma = jax.random.uniform(k3, (C2,), minval=0.5, maxval=1.5)
    bn_beta = jax.random.normal(k4, (C2,)) * 0.1
    bn_mean = jax.random.normal(k5, (C2,)) * 0.1
    bn_var = jax.random.uniform(k6, (C2,), minval=0.5, maxval=1.5)

    # jit the whole forward so the space-to-depth producer can fuse into the
    # Pallas operand (allow_input_fusion) instead of a separate HBM round-trip.
    fwd = jax.jit(focus_forward)
    out = fwd(x, conv_w, bn_gamma, bn_beta, bn_mean, bn_var)
    out = jax.block_until_ready(out)

    ref = focus_reference(x, conv_w, bn_gamma, bn_beta, bn_mean, bn_var)

    assert out.shape == (B, C2, H // 2, W // 2)
    assert bool(jnp.all(jnp.isfinite(out)))
    assert bool(jnp.allclose(out, ref, atol=2e-4, rtol=2e-4)), "mismatch vs reference"
    print("KERNEL_OK")
</pallas_src>

<mosaic_0001>
module attributes {stable_mosaic.version = 11 : i64} {
  func.func @focus_conv_kernel(%arg0: i32, %arg1: i32, %arg2: memref<1x16x64xf32, #tpu.memory_space<vmem>>, %arg3: memref<8x16xf32, #tpu.memory_space<vmem>>, %arg4: memref<8x1xf32, #tpu.memory_space<vmem>>, %arg5: memref<1x8x64xf32, #tpu.memory_space<vmem>>) attributes {dimension_semantics = [#tpu.dimension_semantics<parallel>, #tpu.dimension_semantics<parallel>], iteration_bounds = array<i64: 2, 1>, scalar_prefetch = 0 : i64, scratch_operands = 0 : i64, tpu.core_type = #tpu.core_type<tc>, window_params = [{transform_indices = @transform_0, window_bounds = array<i64: 1, 16, 64>}, {pipeline_mode = #tpu.pipeline_mode<synchronous>, transform_indices = @transform_1, window_bounds = array<i64: 8, 16>}, {pipeline_mode = #tpu.pipeline_mode<synchronous>, transform_indices = @transform_2, window_bounds = array<i64: 8, 1>}, {transform_indices = @transform_3, window_bounds = array<i64: 1, 8, 64>}]} {
    %c0 = arith.constant 0 : index
    %c0_0 = arith.constant 0 : index
    %0 = vector.load %arg3[%c0, %c0_0] : memref<8x16xf32, #tpu.memory_space<vmem>>, vector<8x16xf32>
    %c0_1 = arith.constant 0 : index
    %c0_2 = arith.constant 0 : index
    %c0_3 = arith.constant 0 : index
    %1 = vector.load %arg2[%c0_1, %c0_2, %c0_3] : memref<1x16x64xf32, #tpu.memory_space<vmem>>, vector<1x16x64xf32>
    %2 = vector.shape_cast %1 : vector<1x16x64xf32> to vector<16x64xf32>
    %cst = arith.constant dense<0.000000e+00> : vector<8x64xf32>
    %3 = tpu.matmul %0, %2, %cst {dimension_numbers = #tpu.dot_dimension_numbers<[1], [0], [0], [1], [0, 0, 1, 1], [], []>} : vector<8x16xf32>, vector<16x64xf32>, vector<8x64xf32> -> vector<8x64xf32>
    %c0_4 = arith.constant 0 : index
    %c0_5 = arith.constant 0 : index
    %4 = vector.load %arg4[%c0_4, %c0_5] : memref<8x1xf32, #tpu.memory_space<vmem>>, vector<8x1xf32>
    %5 = vector.broadcast %4 : vector<8x1xf32> to vector<8x64xf32>
    %6 = arith.addf %3, %5 : vector<8x64xf32>
    %cst_6 = arith.constant 3.000000e+00 : f32
    %7 = vector.broadcast %cst_6 : f32 to vector<8x64xf32>
    %8 = arith.addf %6, %7 : vector<8x64xf32>
    %cst_7 = arith.constant 0.000000e+00 : f32
    %cst_8 = arith.constant 6.000000e+00 : f32
    %9 = vector.broadcast %cst_7 : f32 to vector<8x64xf32>
    %10 = arith.maximumf %9, %8 : vector<8x64xf32>
    %11 = vector.broadcast %cst_8 : f32 to vector<8x64xf32>
    %12 = arith.minimumf %11, %10 : vector<8x64xf32>
    %13 = arith.mulf %6, %12 : vector<8x64xf32>
    %cst_9 = arith.constant 0.166666672 : f32
    %14 = vector.broadcast %cst_9 : f32 to vector<8x64xf32>
    %15 = arith.mulf %13, %14 : vector<8x64xf32>
    %c0_10 = arith.constant 0 : index
    %c0_11 = arith.constant 0 : index
    %c0_12 = arith.constant 0 : index
    %16 = vector.load %arg5[%c0_10, %c0_11, %c0_12] : memref<1x8x64xf32, #tpu.memory_space<vmem>>, vector<1x8x64xf32>
    %17 = vector.shape_cast %16 : vector<1x8x64xf32> to vector<8x64xf32>
    %18 = vector.shape_cast %15 : vector<8x64xf32> to vector<1x8x64xf32>
    tpu.vector_store %arg5[%c0_10, %c0_11, %c0_12], %18 {strides = array<i32>} : memref<1x8x64xf32, #tpu.memory_space<vmem>>, vector<1x8x64xf32>,
    return
  }
  func.func @transform_0(%arg0: i32, %arg1: i32) -> (i32, i32, i32) {
    %c0_i32 = arith.constant 0 : i32
    %c0_i32_0 = arith.constant 0 : i32
    return %arg0, %c0_i32, %arg1 : i32, i32, i32
  }
  func.func @transform_1(%arg0: i32, %arg1: i32) -> (i32, i32) {
    %c0_i32 = arith.constant 0 : i32
    %c0_i32_0 = arith.constant 0 : i32
    %c0_i32_1 = arith.constant 0 : i32
    return %c0_i32, %c0_i32_0 : i32, i32
  }
  func.func @transform_2(%arg0: i32, %arg1: i32) -> (i32, i32) {
    %c0_i32 = arith.constant 0 : i32
    %c0_i32_0 = arith.constant 0 : i32
    %c0_i32_1 = arith.constant 0 : i32
    return %c0_i32, %c0_i32_0 : i32, i32
  }
  func.func @transform_3(%arg0: i32, %arg1: i32) -> (i32, i32, i32) {
    %c0_i32 = arith.constant 0 : i32
    %c0_i32_0 = arith.constant 0 : i32
    return %arg0, %c0_i32, %arg1 : i32, i32, i32
  }
}

</mosaic_0001>

<llo_original>
// kernel: focus_forward.1
$region0: #{focus_forward.1}
  #allocation0 [shape = 'u32[]', space=smem, size = 0x4, offset = 0x4, fixed_abs, tag = 'smem constant byte address 0x4 - core index']
  #allocation1 [shape = 'u32[72,128]{1,0:T(1,128)}', space=vmem, size = 0x9000, scoped, tag = 'internal scratch']
  %s0 = inlined_call_operand.vmem [shape: f32[2,16,64], index: 0, kind: input, shape index: {}]
  %s1 = inlined_call_operand.vmem [shape: f32[8,16], index: 1, kind: input, shape index: {}]
  %s2 = inlined_call_operand.vmem [shape: f32[8,1], index: 2, kind: input, shape index: {}]
  %s3 = inlined_call_operand.vmem [shape: f32[2,8,64], index: 3, kind: output, shape index: {}]
  %s4 = sld [smem:[#allocation0]]
  $region45: #{focus_forward.1} parent=0
    _
  %s6 = ssub.s32 1, %s4
  %s7 = scalar_select 0, %s6, %s4
  loop: start=0, step=1, limit=4
  $region2: #{focus_forward.1} parent=0 // loop_pre_header
    _
  $region3: #{focus_forward.1} parent=0 // loop_header
    %s9 = sphi 0, %s13
    %p10 = scmp.ge.s32.totalorder %s9, 4
    %s16 = sphi 0, %s28
    %s17 = sphi 0, %s24
    %s18 = sphi 0, %s16
    %s19 = sphi 0, %s17
    %s20 = sphi 0, %s18
    %s21 = sphi 0, %s19
    %s33 = sphi 0, %s35
    %s36 = sphi 0, %s33
    %s37 = sphi 0, %s36
    %s53 = sphi 0, %s37
    %s57 = sphi 0, %s57
    %s59 = sphi 0, %s57
    %s60 = sphi 0, %s59
    %s74 = sphi 0, %s60
    %s78 = sphi 0, %s78
    %s80 = sphi 0, %s78
    %s81 = sphi 0, %s80
    %s95 = sphi 0, %s81
    %s103 = sphi 0, %s105
    %s106 = sphi 0, %s103
    %s107 = sphi 0, %s106
    %s123 = sphi 0, %s107
  $region4: #{focus_forward.1} parent=0 // loop_header_branch
    %12 = sbr.rel (%p10) target = $region8
  $region5: #{focus_forward.1} parent=0 // loop_body
    %s14 = ssub.s32 %s9, 1
    %s15 = ssub.s32 %s9, 2
    %s22 = sadd.s32 1, %s17
    %p23 = scmp.ge.s32.totalorder %s22, 1
    %s24 = scalar_select %p23, 0, %s22
    %s25 = sadd.s32 1, %s16
    %s26 = scalar_select %p23, %s25, %s16
    %p27 = scmp.ge.s32.totalorder %s26, 2
    %s28 = scalar_select %p27, 0, %s26
    %s29 = ssub.s32 %s16, %s28
    %s30 = ssub.s32 %s17, %s24
    %s31 = sor.u32 %s29, %s30
    %p32 = scmp.eq.s32.totalorder %s31, 0
    %s34 = sadd.s32 %s33, 1
    %s35 = scalar_select %p32, %s33, %s34
    %p38 = pneg %p32
    %p39 = scmp.eq.s32.totalorder %s9, 1
    %p40 = por %p38, %p39
    %p41 = scmp.ne.s32.totalorder %s33, %s36
    %p42 = scmp.eq.s32.totalorder %s9, 0
    %p43 = por %p41, %p42
    %p44 = scmp.ne.s32.totalorder %s33, %s36
    %p45 = scmp.eq.s32.totalorder %s14, 1
    %p46 = por %p44, %p45
    %p47 = scmp.ne.s32.totalorder %s36, %s37
    %p48 = scmp.eq.s32.totalorder %s14, 0
    %p49 = por %p47, %p48
    %p50 = scmp.ne.s32.totalorder %s36, %s37
    %p51 = scmp.eq.s32.totalorder %s15, 1
    %p52 = por %p50, %p51
    %p54 = scmp.ne.s32.totalorder %s37, %s53
    %p55 = scmp.eq.s32.totalorder %s15, 0
    %p56 = por %p54, %p55
    %s58 = sadd.s32 %s57, 1
    %p61 = scmp.eq.s32.totalorder %s9, 1
    %p62 = scmp.ne.s32.totalorder %s57, %s59
    %p63 = scmp.eq.s32.totalorder %s9, 0
    %p64 = por %p62, %p63
    %p65 = scmp.ne.s32.totalorder %s57, %s59
    %p66 = scmp.eq.s32.totalorder %s14, 1
    %p67 = por %p65, %p66
    %p68 = scmp.ne.s32.totalorder %s59, %s60
    %p69 = scmp.eq.s32.totalorder %s14, 0
    %p70 = por %p68, %p69
    %p71 = scmp.ne.s32.totalorder %s59, %s60
    %p72 = scmp.eq.s32.totalorder %s15, 1
    %p73 = por %p71, %p72
    %p75 = scmp.ne.s32.totalorder %s60, %s74
    %p76 = scmp.eq.s32.totalorder %s15, 0
    %p77 = por %p75, %p76
    %s79 = sadd.s32 %s78, 1
    %p82 = scmp.eq.s32.totalorder %s9, 1
    %p83 = scmp.ne.s32.totalorder %s78, %s80
    %p84 = scmp.eq.s32.totalorder %s9, 0
    %p85 = por %p83, %p84
    %p86 = scmp.ne.s32.totalorder %s78, %s80
    %p87 = scmp.eq.s32.totalorder %s14, 1
    %p88 = por %p86, %p87
    %p89 = scmp.ne.s32.totalorder %s80, %s81
    %p90 = scmp.eq.s32.totalorder %s14, 0
    %p91 = por %p89, %p90
    %p92 = scmp.ne.s32.totalorder %s80, %s81
    %p93 = scmp.eq.s32.totalorder %s15, 1
    %p94 = por %p92, %p93
    %p96 = scmp.ne.s32.totalorder %s81, %s95
    %p97 = scmp.eq.s32.totalorder %s15, 0
    %p98 = por %p96, %p97
    %s99 = ssub.s32 %s16, %s28
    %s100 = ssub.s32 %s17, %s24
    %s101 = sor.u32 %s99, %s100
    %p102 = scmp.eq.s32.totalorder %s101, 0
    %s104 = sadd.s32 %s103, 1
    %s105 = scalar_select %p102, %s103, %s104
    %p108 = pneg %p102
    %p109 = scmp.eq.s32.totalorder %s9, 1
    %p110 = por %p108, %p109
    %p111 = scmp.ne.s32.totalorder %s103, %s106
    %p112 = scmp.eq.s32.totalorder %s9, 0
    %p113 = por %p111, %p112
    %p114 = scmp.ne.s32.totalorder %s103, %s106
    %p115 = scmp.eq.s32.totalorder %s14, 1
    %p116 = por %p114, %p115
    %p117 = scmp.ne.s32.totalorder %s106, %s107
    %p118 = scmp.eq.s32.totalorder %s14, 0
    %p119 = por %p117, %p118
    %p120 = scmp.ne.s32.totalorder %s106, %s107
    %p121 = scmp.eq.s32.totalorder %s15, 1
    %p122 = por %p120, %p121
    %p124 = scmp.ne.s32.totalorder %s107, %s123
    %p125 = scmp.eq.s32.totalorder %s15, 0
    %p126 = por %p124, %p125
    %p127 = scmp.le.s32.totalorder 1, %s9
    %p128 = scmp.lt.s32.totalorder %s9, 3
    %p129 = pnand %p127, %p128
    %p130 = pneg %p129
    // Predicated region
    $region9: #{focus_forward.1} parent=5 // pred_check
      _
    $region10: #{focus_forward.1} parent=5 // pred_check_branch
      %132 = sbr.rel (%p129) target = $region12
    $region11: #{focus_forward.1} parent=5 // pred_region
      %s133 = ssub.s32 %s9, 1
      // Predicated region
      $region13: #{focus_forward.1} parent=11 // pred_check
        %p134 = pneg %p70
      $region14: #{focus_forward.1} parent=11 // pred_check_branch
        %136 = sbr.rel (%p134) target = $region16
      $region15: #{focus_forward.1} parent=11 // pred_region
        _
      $region16: #{focus_forward.1} parent=11 // pred_fallthru
        _
      // Predicated region
      $region17: #{focus_forward.1} parent=11 // pred_check
        %p137 = pneg %p91
      $region18: #{focus_forward.1} parent=11 // pred_check_branch
        %139 = sbr.rel (%p137) target = $region20
      $region19: #{focus_forward.1} parent=11 // pred_region
        _
      $region20: #{focus_forward.1} parent=11 // pred_fallthru
        _
    $region12: #{focus_forward.1} parent=5 // pred_fallthru
      _
    %p140 = scmp.lt.s32.totalorder %s9, 2
    // Predicated region
    $region21: #{focus_forward.1} parent=5 // pred_check
      %p141 = pneg %p140
    $region22: #{focus_forward.1} parent=5 // pred_check_branch
      %143 = sbr.rel (%p141) target = $region24
    $region23: #{focus_forward.1} parent=5 // pred_region
      // Predicated region
      $region25: #{focus_forward.1} parent=23 // pred_check
        %p144 = pneg %p43
      $region26: #{focus_forward.1} parent=23 // pred_check_branch
        %146 = sbr.rel (%p144) target = $region28
      $region27: #{focus_forward.1} parent=23 // pred_region
        %p147 = scmp.lt.s32.totalorder %s16, 1
        %s148 = scalar_select %p147, %s16, 1
        %p149 = scmp.lt.s32.totalorder %s17, 0
        %s150 = scalar_select %p149, %s17, 0
        %s151 = smul.addr %s148, 2
        %s152 = sadd.s32 %s150, %s151
        %s153 = smul.addr %s152, 8
        %s154 = scalar_lea.vmem %s0, %s153
      $region28: #{focus_forward.1} parent=23 // pred_fallthru
        _
    $region24: #{focus_forward.1} parent=5 // pred_fallthru
      _
    %p155 = scmp.le.s32.totalorder 1, %s9
    %p156 = scmp.lt.s32.totalorder %s9, 3
    %p157 = pnand %p155, %p156
    %p158 = pneg %p157
    // Predicated region
    $region29: #{focus_forward.1} parent=5 // pred_check
      _
    $region30: #{focus_forward.1} parent=5 // pred_check_branch
      %160 = sbr.rel (%p157) target = $region32
    $region31: #{focus_forward.1} parent=5 // pred_region
      %s161 = ssub.s32 %s9, 1
      %p162 = scmp.lt.s32.totalorder %s18, 1
      %s163 = scalar_select %p162, %s18, 1
      %p164 = scmp.lt.s32.totalorder %s19, 0
      %s165 = scalar_select %p164, %s19, 0
      %s166 = smul.addr %s163, 2
      %s167 = sadd.s32 %s165, %s166
      %s168 = smul.addr %s167, 8
      %s169 = scalar_lea.vmem %s0, %s168
      %p170 = pneg %p49
      %p171 = pneg %p46
      %p172 = pneg %p70
      %p173 = pneg %p67
      %p174 = pneg %p91
      %p175 = pneg %p88
      %p176 = pneg %p119
      %p177 = pneg %p116
      %p178 = scmp.lt.s32.totalorder %s18, 1
      %s179 = scalar_select %p178, %s18, 1
      %p180 = scmp.lt.s32.totalorder %s19, 0
      %s181 = scalar_select %p180, %s19, 0
      %s182 = sadd.s32 %s181, %s179
      %s183 = smul.addr %s182, 8
      %s184 = scalar_lea.vmem %s3, %s183
      %p185 = scmp.lt.s32.totalorder %s18, 1
      %s186 = scalar_select %p185, %s18, 1
      %p187 = scmp.lt.s32.totalorder %s19, 0
      %s188 = scalar_select %p187, %s19, 0
      %s189 = smul.addr %s186, 2
      %s190 = sadd.s32 %s188, %s189
      %s191 = smul.addr %s190, 8
      %s192 = scalar_lea.vmem %s0, %s191
      %p193 = scmp.lt.s32.totalorder %s18, 1
      %s194 = scalar_select %p193, %s18, 1
      %p195 = scmp.lt.s32.totalorder %s19, 0
      %s196 = scalar_select %p195, %s19, 0
      %s197 = sadd.s32 %s196, %s194
      %s198 = smul.addr %s197, 8
      %s199 = scalar_lea.vmem %s3, %s198
      %v200 = vld [vmem:[%s1] sm:$0xff]
      %v201 = vld [vmem:[%s192] sm:$0xff]
      %v202 = vld [vmem:[%s192 + $0x8] sm:$0xff]
      %v203 = vld [vmem:[%s2] sm:$0xff]
      %205 = vset.pattern.permute.xlu0 0
      %206 = vperm.xlu0 %205, %v203
      %v207 = vpop.permute.xlu0 %206
      %vm209 = vcmask 130048
      %v211 = vsel %vm209, %v200, 0
      %213 = vmatpush.msra.mxu0 0.0
      %214 = vmatpush.msra.mxu0 0.0
      %215 = vmatpush.msra.mxu0 0.0
      %216 = vmatpush.msra.mxu0 0.0
      %217 = vmatpush.msra.mxu0 0.0
      %218 = vmatpush.msra.mxu0 0.0
      %219 = vmatpush.msra.mxu0 0.0
      %220 = vmatpush.msra.mxu0 0.0
      %221 = vmatpush.msra.mxu0 0.0
      %222 = vmatpush.msra.mxu0 0.0
      %223 = vmatpush.msra.mxu0 0.0
      %224 = vmatpush.msra.mxu0 0.0
      %225 = vmatpush.msra.mxu0 0.0
      %226 = vmatpush.msra.mxu0 0.0
      %227 = vmatpush.msra.mxu0 %v202
      %228 = vmatpush.msra.mxu0 %v201
      %229 = vmatmul.f32.gmra.mxu0 %v211
      %v230 = vpop.f32.mrf.mxu0
      %v231 = vadd.f32 %v207, %v230
      %232 = vdwg.mxu0
      %v233 = vadd.f32 %v231, 3.0
      %v234 = vmax.f32 %v233, 0.0
      %v235 = vmin.f32 %v234, 6.0
      %v236 = vmul.f32 %v231, %v235
      %v237 = vmul.f32 %v236, 0.16666667
      %vm238 = vcmask 523264
      %239 = vst.msk [vmem:[%s199] sm:$0xff] %vm238, %v237
      %p240 = scmp.lt.s32.totalorder %s18, 1
      %s241 = scalar_select %p240, %s18, 1
      %p242 = scmp.lt.s32.totalorder %s19, 0
      %s243 = scalar_select %p242, %s19, 0
      %s244 = sadd.s32 %s243, %s241
      %s245 = smul.addr %s244, 8
      %s246 = scalar_lea.vmem %s3, %s245
      // Predicated region
      $region33: #{focus_forward.1} parent=31 // pred_check
        %p247 = pneg %p116
      $region34: #{focus_forward.1} parent=31 // pred_check_branch
        %249 = sbr.rel (%p247) target = $region36
      $region35: #{focus_forward.1} parent=31 // pred_region
        _
      $region36: #{focus_forward.1} parent=31 // pred_fallthru
        _
    $region32: #{focus_forward.1} parent=5 // pred_fallthru
      _
    %p250 = scmp.le.s32.totalorder 2, %s9
    // Predicated region
    $region37: #{focus_forward.1} parent=5 // pred_check
      %p251 = pneg %p250
    $region38: #{focus_forward.1} parent=5 // pred_check_branch
      %253 = sbr.rel (%p251) target = $region40
    $region39: #{focus_forward.1} parent=5 // pred_region
      %s254 = ssub.s32 %s9, 2
      // Predicated region
      $region41: #{focus_forward.1} parent=39 // pred_check
        %p255 = pneg %p122
      $region42: #{focus_forward.1} parent=39 // pred_check_branch
        %257 = sbr.rel (%p255) target = $region44
      $region43: #{focus_forward.1} parent=39 // pred_region
        %p258 = scmp.lt.s32.totalorder %s20, 1
        %s259 = scalar_select %p258, %s20, 1
        %p260 = scmp.lt.s32.totalorder %s21, 0
        %s261 = scalar_select %p260, %s21, 0
        %s262 = sadd.s32 %s261, %s259
        %s263 = smul.addr %s262, 8
        %s264 = scalar_lea.vmem %s3, %s263
      $region44: #{focus_forward.1} parent=39 // pred_fallthru
        _
    $region40: #{focus_forward.1} parent=5 // pred_fallthru
      _
  $region6: #{focus_forward.1} parent=0 // loop_footer
    %s13 = sadd.s32 1, %s9
  $region7: #{focus_forward.1} parent=0 // loop_footer_branch
    %8 = sbr.rel target = $region3
  $region8: #{focus_forward.1} parent=0 // loop_exit
    _

</llo_original>
